<compile_context>
chip_gen: v5e
topology: v5e:2x2
jax: 0.10.0
libtpu: 0.0.40
codegen_flags: <defaults>
</compile_context>

<pallas_src>
import functools

import numpy as np

import jax
import jax.numpy as jnp
from jax.experimental import pallas as pl
from jax.experimental.pallas import tpu as pltpu


# ------------------------------ fused kernel -------------------------------

def _lenet_fused_kernel(x_ref, w1p_ref, b1_ref, w2p_ref, b2_ref,
                        sel_ref, mask_ref,
                        wfc1_ref, bfc1_ref, wfc2_ref, bfc2_ref,
                        wfc3_ref, bfc3_ref, out_ref, *, width):
    lanes = x_ref.shape[-1]          # H*W lanes of one sample frame

    def lane_shift(frame, s):
        # shifted[:, l] == frame[:, (l + s) % lanes].  Wrap-around only touches
        # lanes that never feed a sel-selected output (asserted at pack time).
        if s == 0:
            return frame
        return pltpu.roll(frame, shift=lanes - s, axis=1)

    def conv2x2_relu(frame, wpk_ref, bias_ref, step):
        # Fuse the 4 kernel taps into ONE matmul: stack the 4 lane-rolled
        # frames along sublanes -> (4*Cin, H*W); weights packed as (Cout, 4*Cin).
        taps = [lane_shift(frame, (kh * width + kw) * step)
                for kh in range(2) for kw in range(2)]
        stacked = jnp.concatenate(taps, axis=0).astype(jnp.bfloat16)
        acc = jnp.dot(wpk_ref[...], stacked, preferred_element_type=jnp.float32)
        return jnp.maximum(acc + bias_ref[...], 0.0)          # f32 VPU math

    def maxpool2x2(frame, step):
        # 2x2 / stride-2 max pool; result stays at every other valid lane.
        pooled = frame
        for di in range(2):
            for dj in range(2):
                if di == 0 and dj == 0:
                    continue
                pooled = jnp.maximum(
                    pooled, lane_shift(frame, (di * width + dj) * step))
        return pooled

    x = x_ref[...]                                      # (Cin_pad, H*W) f32
    act = conv2x2_relu(x, w1p_ref, b1_ref, step=1)      # valid @ ho*W + wo
    act = maxpool2x2(act, step=1)                       # valid @ 2i*W + 2j
    act = conv2x2_relu(act, w2p_ref, b2_ref, step=2)    # valid @ 2i*W + 2j
    act = maxpool2x2(act, step=2)                       # valid @ 4p*W + 4q

    # Flatten = (gather of valid pool2 lanes) + (NCHW flatten), as two MXU
    # matmuls (no XLU cross-sublane reduction):
    #   gathered[c, j] = act[c, lane(j)]         via 0/1 sel  (H*W, FLAT)
    #   flat[0, j]     = gathered[c(j), j]       via 0/1 mask + ones-row matmul
    gathered = jnp.dot(act.astype(jnp.bfloat16), sel_ref[...],
                       preferred_element_type=jnp.float32)        # (C2, FLAT)
    masked = gathered * mask_ref[...]
    ones_row = jnp.ones((1, masked.shape[0]), jnp.float32)
    flat = jnp.dot(ones_row, masked,
                   preferred_element_type=jnp.float32)            # (1, FLAT)

    h = jnp.maximum(
        jnp.dot(flat.astype(jnp.bfloat16), wfc1_ref[...],
                preferred_element_type=jnp.float32) + bfc1_ref[...], 0.0)
    h = jnp.maximum(
        jnp.dot(h.astype(jnp.bfloat16), wfc2_ref[...],
                preferred_element_type=jnp.float32) + bfc2_ref[...], 0.0)
    logits = jnp.dot(h.astype(jnp.bfloat16), wfc3_ref[...],
                     preferred_element_type=jnp.float32) + bfc3_ref[...]
    out_ref[...] = logits.astype(out_ref.dtype)


# ------------------------- params: init + packing --------------------------

def init_lenet_params(key, shape, fc):
    kernel = (2, 2)
    num_fc1, num_fc2 = shape
    for _ in range(2):
        num_fc1 = int((num_fc1 - kernel[0] + 1) / 2)
        num_fc2 = int((num_fc2 - kernel[1] + 1) / 2)

    def uinit(k, shp, fan_in):
        bound = 1.0 / jnp.sqrt(float(fan_in))
        return jax.random.uniform(k, shp, jnp.float32, -bound, bound)

    ks = jax.random.split(key, 10)
    flat = 16 * num_fc1 * num_fc2
    return {
        "conv1_w": uinit(ks[0], (8, 3, 2, 2), 3 * 2 * 2),
        "conv1_b": uinit(ks[1], (8,), 3 * 2 * 2),
        "conv2_w": uinit(ks[2], (16, 8, 2, 2), 8 * 2 * 2),
        "conv2_b": uinit(ks[3], (16,), 8 * 2 * 2),
        "fc1_w": uinit(ks[4], (100, flat), flat),
        "fc1_b": uinit(ks[5], (100,), flat),
        "fc2_w": uinit(ks[6], (20, 100), 100),
        "fc2_b": uinit(ks[7], (20,), 100),
        "fc3_w": uinit(ks[8], (fc, 20), 20),
        "fc3_b": uinit(ks[9], (fc,), 20),
    }


def pack_lenet_params(params, shape):
    """One-time weight re-layout for the fused kernel (run outside jit)."""
    H, W = shape
    h1, w1 = H - 1, W - 1            # after conv1 (2x2, valid)
    p1h, p1w = h1 // 2, w1 // 2      # after pool1 (floor)
    h2, w2 = p1h - 1, p1w - 1        # after conv2
    p2h, p2w = h2 // 2, w2 // 2      # after pool2
    assert p2h >= 1 and p2w >= 1, "input spatial size too small for LeNet"
    # Roll-wraparound safety: the deepest input pixel feeding any sel-selected
    # pool2 value is at row/col (4*p2h + 2, 4*p2w + 2); it must be inside the
    # sample frame so lane rolls never wrap onto values that get selected.
    assert 4 * p2h + 2 <= H - 1 and 4 * p2w + 2 <= W - 1, "roll wrap unsafe"
    c2 = params["conv2_w"].shape[0]
    flat = c2 * p2h * p2w

    def pack_conv(w):
        # (Cout, Cin, KH, KW) -> (Cout, KH*KW*Cin_pad), tap-major columns,
        # Cin zero-padded to a multiple of 8 (sublane-aligned stacking).
        cout, cin, kh, kw = w.shape
        cin_pad = -(-cin // 8) * 8
        wp = jnp.zeros((cout, kh, kw, cin_pad), w.dtype)
        wp = wp.at[..., :cin].set(jnp.transpose(w, (0, 2, 3, 1)))
        return wp.reshape(cout, kh * kw * cin_pad).astype(jnp.bfloat16)

    # 0/1 matrices folding the pool2 lane gather + NCHW flatten into matmuls.
    # Valid pool2 value (c, p, q) sits at lane (4p)*W + 4q of its sample frame;
    # PyTorch flatten order is j = c*(p2h*p2w) + p*p2w + q.
    sel = np.zeros((H * W, flat), np.float32)
    mask = np.zeros((c2, flat), np.float32)
    for c in range(c2):
        for p in range(p2h):
            for q in range(p2w):
                j = c * (p2h * p2w) + p * p2w + q
                sel[(4 * p) * W + 4 * q, j] = 1.0
                mask[c, j] = 1.0

    return {
        "w1p": pack_conv(params["conv1_w"]),
        "b1": params["conv1_b"].reshape(-1, 1).astype(jnp.float32),
        "w2p": pack_conv(params["conv2_w"]),
        "b2": params["conv2_b"].reshape(-1, 1).astype(jnp.float32),
        "sel": jnp.asarray(sel).astype(jnp.bfloat16),      # 0/1 exact in bf16
        "mask": jnp.asarray(mask),                         # f32, 0/1
        "wfc1": params["fc1_w"].T.astype(jnp.bfloat16),
        "bfc1": params["fc1_b"].reshape(1, -1).astype(jnp.float32),
        "wfc2": params["fc2_w"].T.astype(jnp.bfloat16),
        "bfc2": params["fc2_b"].reshape(1, -1).astype(jnp.float32),
        "wfc3": params["fc3_w"].T.astype(jnp.bfloat16),
        "bfc3": params["fc3_b"].reshape(1, -1).astype(jnp.float32),
    }


# -------------------------------- forward ----------------------------------

def lenet_forward(packed, x):
    n_batch, cin, H, W = x.shape
    hw = H * W
    fc_out = packed["wfc3"].shape[1]
    cin_pad = packed["w1p"].shape[1] // 4      # input channels padded to 8

    # Layout plumbing only: per-sample (Cin_pad, H*W) frames, spatial on lanes.
    x_frames = x.reshape(n_batch, cin, hw)
    if cin_pad != cin:
        x_frames = jnp.pad(x_frames, ((0, 0), (0, cin_pad - cin), (0, 0)))

    operands = (x_frames,
                packed["w1p"], packed["b1"], packed["w2p"], packed["b2"],
                packed["sel"], packed["mask"],
                packed["wfc1"], packed["bfc1"],
                packed["wfc2"], packed["bfc2"],
                packed["wfc3"], packed["bfc3"])

    # Batch is a "parallel" grid axis (v7x: sharded across both TensorCores).
    # Only the input frame / logits have batch-dependent index maps; every
    # weight block is constant across steps, so it is DMA'd once and stays
    # VMEM-resident.  For big batches on v6e, fold several samples per step.
    in_specs = [pl.BlockSpec((None, cin_pad, hw), lambda i: (i, 0, 0))]
    for op in operands[1:]:
        in_specs.append(
            pl.BlockSpec(op.shape, lambda i, _nd=op.ndim: (0,) * _nd))

    kernel = functools.partial(_lenet_fused_kernel, width=W)

    out = pl.pallas_call(
        kernel,
        out_shape=jax.ShapeDtypeStruct((n_batch, 1, fc_out), jnp.float32),
        grid=(n_batch,),
        in_specs=in_specs,
        out_specs=pl.BlockSpec((None, 1, fc_out), lambda i: (i, 0, 0)),
        compiler_params=pltpu.CompilerParams(
            dimension_semantics=("parallel",)),
    )(*operands)
    return out.reshape(n_batch, fc_out)


# ------------------------- plain-JAX reference ------------------------------

def lenet_reference(params, x):
    """Plain-JAX reference matching the PyTorch module (validation only)."""
    dn = ("NCHW", "OIHW", "NCHW")
    hi = jax.lax.Precision.HIGHEST
    out = jax.lax.conv_general_dilated(x, params["conv1_w"], (1, 1), "VALID",
                                       dimension_numbers=dn, precision=hi)
    out = jax.nn.relu(out + params["conv1_b"].reshape(1, -1, 1, 1))
    out = jax.lax.reduce_window(out, -jnp.inf, jax.lax.max,
                                (1, 1, 2, 2), (1, 1, 2, 2), "VALID")
    out = jax.lax.conv_general_dilated(out, params["conv2_w"], (1, 1), "VALID",
                                       dimension_numbers=dn, precision=hi)
    out = jax.nn.relu(out + params["conv2_b"].reshape(1, -1, 1, 1))
    out = jax.lax.reduce_window(out, -jnp.inf, jax.lax.max,
                                (1, 1, 2, 2), (1, 1, 2, 2), "VALID")
    out = out.reshape(out.shape[0], -1)
    out = jax.nn.relu(jnp.dot(out, params["fc1_w"].T, precision=hi) + params["fc1_b"])
    out = jax.nn.relu(jnp.dot(out, params["fc2_w"].T, precision=hi) + params["fc2_b"])
    return jnp.dot(out, params["fc3_w"].T, precision=hi) + params["fc3_b"]


# ---------------------------------- main ------------------------------------

if __name__ == "__main__":
    key = jax.random.PRNGKey(0)
    k_params, k_x = jax.random.split(key)

    shape = (16, 16)   # input spatial size
    fc = 10            # final output width
    batch = 2

    params = init_lenet_params(k_params, shape, fc)
    packed = pack_lenet_params(params, shape)
    x = jax.random.normal(k_x, (batch, 3, shape[0], shape[1]), dtype=jnp.float32)

    y = jax.jit(lenet_forward)(packed, x)
    jax.block_until_ready(y)

    assert y.shape == (batch, fc), y.shape
    assert y.dtype == jnp.float32

    # Loose tolerance: bf16-operand MXU matmuls (f32 accumulation) vs. the
    # HIGHEST-precision XLA reference; observed error is ~1e-2 at these scales.
    y_ref = lenet_reference(params, x)
    max_err = float(jnp.max(jnp.abs(y - y_ref)))
    assert max_err < 1e-1, f"kernel/reference mismatch: max|diff|={max_err}"

    print("KERNEL_OK")
</pallas_src>

<mosaic_0001>
module attributes {stable_mosaic.version = 11 : i64} {
  func.func @_lenet_fused_kernel(%arg0: i32, %arg1: memref<1x8x256xf32, #tpu.memory_space<vmem>>, %arg2: memref<8x32xbf16, #tpu.memory_space<vmem>>, %arg3: memref<8x1xf32, #tpu.memory_space<vmem>>, %arg4: memref<16x32xbf16, #tpu.memory_space<vmem>>, %arg5: memref<16x1xf32, #tpu.memory_space<vmem>>, %arg6: memref<256x144xbf16, #tpu.memory_space<vmem>>, %arg7: memref<16x144xf32, #tpu.memory_space<vmem>>, %arg8: memref<144x100xbf16, #tpu.memory_space<vmem>>, %arg9: memref<1x100xf32, #tpu.memory_space<vmem>>, %arg10: memref<100x20xbf16, #tpu.memory_space<vmem>>, %arg11: memref<1x20xf32, #tpu.memory_space<vmem>>, %arg12: memref<20x10xbf16, #tpu.memory_space<vmem>>, %arg13: memref<1x10xf32, #tpu.memory_space<vmem>>, %arg14: memref<1x1x10xf32, #tpu.memory_space<vmem>>) attributes {dimension_semantics = [#tpu.dimension_semantics<parallel>], iteration_bounds = array<i64: 2>, scalar_prefetch = 0 : i64, scratch_operands = 0 : i64, tpu.core_type = #tpu.core_type<tc>, window_params = [{transform_indices = @transform_0, window_bounds = array<i64: 1, 8, 256>}, {pipeline_mode = #tpu.pipeline_mode<synchronous>, transform_indices = @transform_1, window_bounds = array<i64: 8, 32>}, {pipeline_mode = #tpu.pipeline_mode<synchronous>, transform_indices = @transform_2, window_bounds = array<i64: 8, 1>}, {pipeline_mode = #tpu.pipeline_mode<synchronous>, transform_indices = @transform_3, window_bounds = array<i64: 16, 32>}, {pipeline_mode = #tpu.pipeline_mode<synchronous>, transform_indices = @transform_4, window_bounds = array<i64: 16, 1>}, {pipeline_mode = #tpu.pipeline_mode<synchronous>, transform_indices = @transform_5, window_bounds = array<i64: 256, 144>}, {pipeline_mode = #tpu.pipeline_mode<synchronous>, transform_indices = @transform_6, window_bounds = array<i64: 16, 144>}, {pipeline_mode = #tpu.pipeline_mode<synchronous>, transform_indices = @transform_7, window_bounds = array<i64: 144, 100>}, {pipeline_mode = #tpu.pipeline_mode<synchronous>, transform_indices = @transform_8, window_bounds = array<i64: 1, 100>}, {pipeline_mode = #tpu.pipeline_mode<synchronous>, transform_indices = @transform_9, window_bounds = array<i64: 100, 20>}, {pipeline_mode = #tpu.pipeline_mode<synchronous>, transform_indices = @transform_10, window_bounds = array<i64: 1, 20>}, {pipeline_mode = #tpu.pipeline_mode<synchronous>, transform_indices = @transform_11, window_bounds = array<i64: 20, 10>}, {pipeline_mode = #tpu.pipeline_mode<synchronous>, transform_indices = @transform_12, window_bounds = array<i64: 1, 10>}, {transform_indices = @transform_13, window_bounds = array<i64: 1, 1, 10>}]} {
    %c0 = arith.constant 0 : index
    %c0_0 = arith.constant 0 : index
    %c0_1 = arith.constant 0 : index
    %0 = vector.load %arg1[%c0, %c0_0, %c0_1] : memref<1x8x256xf32, #tpu.memory_space<vmem>>, vector<1x8x256xf32>
    %1 = vector.shape_cast %0 : vector<1x8x256xf32> to vector<8x256xf32>
    %c255_i32 = arith.constant 255 : i32
    %2 = tpu.dynamic_rotate %1 by %c255_i32 dim 1 : vector<8x256xf32>, i32 -> vector<8x256xf32>
    %c240_i32 = arith.constant 240 : i32
    %3 = tpu.dynamic_rotate %1 by %c240_i32 dim 1 : vector<8x256xf32>, i32 -> vector<8x256xf32>
    %c239_i32 = arith.constant 239 : i32
    %4 = tpu.dynamic_rotate %1 by %c239_i32 dim 1 : vector<8x256xf32>, i32 -> vector<8x256xf32>
    %5 = tpu.concatenate %1, %2, %3, %4 in 0 : vector<8x256xf32>, vector<8x256xf32>, vector<8x256xf32>, vector<8x256xf32> -> vector<32x256xf32>
    %6 = arith.truncf %5 : vector<32x256xf32> to vector<32x256xbf16>
    %c0_2 = arith.constant 0 : index
    %c0_3 = arith.constant 0 : index
    %7 = vector.load %arg2[%c0_2, %c0_3] : memref<8x32xbf16, #tpu.memory_space<vmem>>, vector<8x32xbf16>
    %cst = arith.constant dense<0.000000e+00> : vector<8x256xf32>
    %8 = tpu.matmul %7, %6, %cst {dimension_numbers = #tpu.dot_dimension_numbers<[1], [0], [0], [1], [0, 0, 1, 1], [], []>} : vector<8x32xbf16>, vector<32x256xbf16>, vector<8x256xf32> -> vector<8x256xf32>
    %c0_4 = arith.constant 0 : index
    %c0_5 = arith.constant 0 : index
    %9 = vector.load %arg3[%c0_4, %c0_5] : memref<8x1xf32, #tpu.memory_space<vmem>>, vector<8x1xf32>
    %10 = vector.broadcast %9 : vector<8x1xf32> to vector<8x256xf32>
    %11 = arith.addf %8, %10 : vector<8x256xf32>
    %cst_6 = arith.constant 0.000000e+00 : f32
    %12 = vector.broadcast %cst_6 : f32 to vector<8x256xf32>
    %13 = arith.maximumf %11, %12 : vector<8x256xf32>
    %c255_i32_7 = arith.constant 255 : i32
    %14 = tpu.dynamic_rotate %13 by %c255_i32_7 dim 1 : vector<8x256xf32>, i32 -> vector<8x256xf32>
    %15 = arith.maximumf %13, %14 : vector<8x256xf32>
    %c240_i32_8 = arith.constant 240 : i32
    %16 = tpu.dynamic_rotate %13 by %c240_i32_8 dim 1 : vector<8x256xf32>, i32 -> vector<8x256xf32>
    %17 = arith.maximumf %15, %16 : vector<8x256xf32>
    %c239_i32_9 = arith.constant 239 : i32
    %18 = tpu.dynamic_rotate %13 by %c239_i32_9 dim 1 : vector<8x256xf32>, i32 -> vector<8x256xf32>
    %19 = arith.maximumf %17, %18 : vector<8x256xf32>
    %c254_i32 = arith.constant 254 : i32
    %20 = tpu.dynamic_rotate %19 by %c254_i32 dim 1 : vector<8x256xf32>, i32 -> vector<8x256xf32>
    %c224_i32 = arith.constant 224 : i32
    %21 = tpu.dynamic_rotate %19 by %c224_i32 dim 1 : vector<8x256xf32>, i32 -> vector<8x256xf32>
    %c222_i32 = arith.constant 222 : i32
    %22 = tpu.dynamic_rotate %19 by %c222_i32 dim 1 : vector<8x256xf32>, i32 -> vector<8x256xf32>
    %23 = tpu.concatenate %19, %20, %21, %22 in 0 : vector<8x256xf32>, vector<8x256xf32>, vector<8x256xf32>, vector<8x256xf32> -> vector<32x256xf32>
    %24 = arith.truncf %23 : vector<32x256xf32> to vector<32x256xbf16>
    %c0_10 = arith.constant 0 : index
    %c0_11 = arith.constant 0 : index
    %25 = vector.load %arg4[%c0_10, %c0_11] : memref<16x32xbf16, #tpu.memory_space<vmem>>, vector<16x32xbf16>
    %cst_12 = arith.constant dense<0.000000e+00> : vector<16x256xf32>
    %26 = tpu.matmul %25, %24, %cst_12 {dimension_numbers = #tpu.dot_dimension_numbers<[1], [0], [0], [1], [0, 0, 1, 1], [], []>} : vector<16x32xbf16>, vector<32x256xbf16>, vector<16x256xf32> -> vector<16x256xf32>
    %c0_13 = arith.constant 0 : index
    %c0_14 = arith.constant 0 : index
    %27 = vector.load %arg5[%c0_13, %c0_14] : memref<16x1xf32, #tpu.memory_space<vmem>>, vector<16x1xf32>
    %28 = vector.broadcast %27 : vector<16x1xf32> to vector<16x256xf32>
    %29 = arith.addf %26, %28 : vector<16x256xf32>
    %cst_15 = arith.constant 0.000000e+00 : f32
    %30 = vector.broadcast %cst_15 : f32 to vector<16x256xf32>
    %31 = arith.maximumf %29, %30 : vector<16x256xf32>
    %c254_i32_16 = arith.constant 254 : i32
    %32 = tpu.dynamic_rotate %31 by %c254_i32_16 dim 1 : vector<16x256xf32>, i32 -> vector<16x256xf32>
    %33 = arith.maximumf %31, %32 : vector<16x256xf32>
    %c224_i32_17 = arith.constant 224 : i32
    %34 = tpu.dynamic_rotate %31 by %c224_i32_17 dim 1 : vector<16x256xf32>, i32 -> vector<16x256xf32>
    %35 = arith.maximumf %33, %34 : vector<16x256xf32>
    %c222_i32_18 = arith.constant 222 : i32
    %36 = tpu.dynamic_rotate %31 by %c222_i32_18 dim 1 : vector<16x256xf32>, i32 -> vector<16x256xf32>
    %37 = arith.maximumf %35, %36 : vector<16x256xf32>
    %38 = arith.truncf %37 : vector<16x256xf32> to vector<16x256xbf16>
    %c0_19 = arith.constant 0 : index
    %c0_20 = arith.constant 0 : index
    %39 = vector.load %arg6[%c0_19, %c0_20] : memref<256x144xbf16, #tpu.memory_space<vmem>>, vector<256x144xbf16>
    %cst_21 = arith.constant dense<0.000000e+00> : vector<16x144xf32>
    %40 = tpu.matmul %38, %39, %cst_21 {dimension_numbers = #tpu.dot_dimension_numbers<[1], [0], [0], [1], [0, 0, 1, 1], [], []>} : vector<16x256xbf16>, vector<256x144xbf16>, vector<16x144xf32> -> vector<16x144xf32>
    %c0_22 = arith.constant 0 : index
    %c0_23 = arith.constant 0 : index
    %41 = vector.load %arg7[%c0_22, %c0_23] : memref<16x144xf32, #tpu.memory_space<vmem>>, vector<16x144xf32>
    %42 = arith.mulf %40, %41 : vector<16x144xf32>
    %cst_24 = arith.constant 1.000000e+00 : f32
    %43 = vector.broadcast %cst_24 : f32 to vector<1x16xf32>
    %cst_25 = arith.constant dense<0.000000e+00> : vector<1x144xf32>
    %44 = tpu.matmul %43, %42, %cst_25 {dimension_numbers = #tpu.dot_dimension_numbers<[1], [0], [0], [1], [0, 0, 1, 1], [], []>} : vector<1x16xf32>, vector<16x144xf32>, vector<1x144xf32> -> vector<1x144xf32>
    %45 = arith.truncf %44 : vector<1x144xf32> to vector<1x144xbf16>
    %c0_26 = arith.constant 0 : index
    %c0_27 = arith.constant 0 : index
    %46 = vector.load %arg8[%c0_26, %c0_27] : memref<144x100xbf16, #tpu.memory_space<vmem>>, vector<144x100xbf16>
    %cst_28 = arith.constant dense<0.000000e+00> : vector<1x100xf32>
    %47 = tpu.matmul %45, %46, %cst_28 {dimension_numbers = #tpu.dot_dimension_numbers<[1], [0], [0], [1], [0, 0, 1, 1], [], []>} : vector<1x144xbf16>, vector<144x100xbf16>, vector<1x100xf32> -> vector<1x100xf32>
    %c0_29 = arith.constant 0 : index
    %c0_30 = arith.constant 0 : index
    %48 = vector.load %arg9[%c0_29, %c0_30] : memref<1x100xf32, #tpu.memory_space<vmem>>, vector<1x100xf32>
    %49 = arith.addf %47, %48 : vector<1x100xf32>
    %cst_31 = arith.constant 0.000000e+00 : f32
    %50 = vector.broadcast %cst_31 : f32 to vector<1x100xf32>
    %51 = arith.maximumf %49, %50 : vector<1x100xf32>
    %52 = arith.truncf %51 : vector<1x100xf32> to vector<1x100xbf16>
    %c0_32 = arith.constant 0 : index
    %c0_33 = arith.constant 0 : index
    %53 = vector.load %arg10[%c0_32, %c0_33] : memref<100x20xbf16, #tpu.memory_space<vmem>>, vector<100x20xbf16>
    %cst_34 = arith.constant dense<0.000000e+00> : vector<1x20xf32>
    %54 = tpu.matmul %52, %53, %cst_34 {dimension_numbers = #tpu.dot_dimension_numbers<[1], [0], [0], [1], [0, 0, 1, 1], [], []>} : vector<1x100xbf16>, vector<100x20xbf16>, vector<1x20xf32> -> vector<1x20xf32>
    %c0_35 = arith.constant 0 : index
    %c0_36 = arith.constant 0 : index
    %55 = vector.load %arg11[%c0_35, %c0_36] : memref<1x20xf32, #tpu.memory_space<vmem>>, vector<1x20xf32>
    %56 = arith.addf %54, %55 : vector<1x20xf32>
    %cst_37 = arith.constant 0.000000e+00 : f32
    %57 = vector.broadcast %cst_37 : f32 to vector<1x20xf32>
    %58 = arith.maximumf %56, %57 : vector<1x20xf32>
    %59 = arith.truncf %58 : vector<1x20xf32> to vector<1x20xbf16>
    %c0_38 = arith.constant 0 : index
    %c0_39 = arith.constant 0 : index
    %60 = vector.load %arg12[%c0_38, %c0_39] : memref<20x10xbf16, #tpu.memory_space<vmem>>, vector<20x10xbf16>
    %cst_40 = arith.constant dense<0.000000e+00> : vector<1x10xf32>
    %61 = tpu.matmul %59, %60, %cst_40 {dimension_numbers = #tpu.dot_dimension_numbers<[1], [0], [0], [1], [0, 0, 1, 1], [], []>} : vector<1x20xbf16>, vector<20x10xbf16>, vector<1x10xf32> -> vector<1x10xf32>
    %c0_41 = arith.constant 0 : index
    %c0_42 = arith.constant 0 : index
    %62 = vector.load %arg13[%c0_41, %c0_42] : memref<1x10xf32, #tpu.memory_space<vmem>>, vector<1x10xf32>
    %63 = arith.addf %61, %62 : vector<1x10xf32>
    %c0_43 = arith.constant 0 : index
    %c0_44 = arith.constant 0 : index
    %c0_45 = arith.constant 0 : index
    %64 = vector.load %arg14[%c0_43, %c0_44, %c0_45] : memref<1x1x10xf32, #tpu.memory_space<vmem>>, vector<1x1x10xf32>
    %65 = vector.shape_cast %64 : vector<1x1x10xf32> to vector<1x10xf32>
    %66 = vector.shape_cast %63 : vector<1x10xf32> to vector<1x1x10xf32>
    tpu.vector_store %arg14[%c0_43, %c0_44, %c0_45], %66 {strides = array<i32>} : memref<1x1x10xf32, #tpu.memory_space<vmem>>, vector<1x1x10xf32>,
    return
  }
  func.func @transform_0(%arg0: i32) -> (i32, i32, i32) {
    %c0_i32 = arith.constant 0 : i32
    %c0_i32_0 = arith.constant 0 : i32
    %c0_i32_1 = arith.constant 0 : i32
    return %arg0, %c0_i32, %c0_i32_0 : i32, i32, i32
  }
  func.func @transform_1(%arg0: i32) -> (i32, i32) {
    %c0_i32 = arith.constant 0 : i32
    %c0_i32_0 = arith.constant 0 : i32
    %c0_i32_1 = arith.constant 0 : i32
    return %c0_i32, %c0_i32_0 : i32, i32
  }
  func.func @transform_2(%arg0: i32) -> (i32, i32) {
    %c0_i32 = arith.constant 0 : i32
    %c0_i32_0 = arith.constant 0 : i32
    %c0_i32_1 = arith.constant 0 : i32
    return %c0_i32, %c0_i32_0 : i32, i32
  }
  func.func @transform_3(%arg0: i32) -> (i32, i32) {
    %c0_i32 = arith.constant 0 : i32
    %c0_i32_0 = arith.constant 0 : i32
    %c0_i32_1 = arith.constant 0 : i32
    return %c0_i32, %c0_i32_0 : i32, i32
  }
  func.func @transform_4(%arg0: i32) -> (i32, i32) {
    %c0_i32 = arith.constant 0 : i32
    %c0_i32_0 = arith.constant 0 : i32
    %c0_i32_1 = arith.constant 0 : i32
    return %c0_i32, %c0_i32_0 : i32, i32
  }
  func.func @transform_5(%arg0: i32) -> (i32, i32) {
    %c0_i32 = arith.constant 0 : i32
    %c0_i32_0 = arith.constant 0 : i32
    %c0_i32_1 = arith.constant 0 : i32
    return %c0_i32, %c0_i32_0 : i32, i32
  }
  func.func @transform_6(%arg0: i32) -> (i32, i32) {
    %c0_i32 = arith.constant 0 : i32
    %c0_i32_0 = arith.constant 0 : i32
    %c0_i32_1 = arith.constant 0 : i32
    return %c0_i32, %c0_i32_0 : i32, i32
  }
  func.func @transform_7(%arg0: i32) -> (i32, i32) {
    %c0_i32 = arith.constant 0 : i32
    %c0_i32_0 = arith.constant 0 : i32
    %c0_i32_1 = arith.constant 0 : i32
    return %c0_i32, %c0_i32_0 : i32, i32
  }
  func.func @transform_8(%arg0: i32) -> (i32, i32) {
    %c0_i32 = arith.constant 0 : i32
    %c0_i32_0 = arith.constant 0 : i32
    %c0_i32_1 = arith.constant 0 : i32
    return %c0_i32, %c0_i32_0 : i32, i32
  }
  func.func @transform_9(%arg0: i32) -> (i32, i32) {
    %c0_i32 = arith.constant 0 : i32
    %c0_i32_0 = arith.constant 0 : i32
    %c0_i32_1 = arith.constant 0 : i32
    return %c0_i32, %c0_i32_0 : i32, i32
  }
  func.func @transform_10(%arg0: i32) -> (i32, i32) {
    %c0_i32 = arith.constant 0 : i32
    %c0_i32_0 = arith.constant 0 : i32
    %c0_i32_1 = arith.constant 0 : i32
    return %c0_i32, %c0_i32_0 : i32, i32
  }
  func.func @transform_11(%arg0: i32) -> (i32, i32) {
    %c0_i32 = arith.constant 0 : i32
    %c0_i32_0 = arith.constant 0 : i32
    %c0_i32_1 = arith.constant 0 : i32
    return %c0_i32, %c0_i32_0 : i32, i32
  }
  func.func @transform_12(%arg0: i32) -> (i32, i32) {
    %c0_i32 = arith.constant 0 : i32
    %c0_i32_0 = arith.constant 0 : i32
    %c0_i32_1 = arith.constant 0 : i32
    return %c0_i32, %c0_i32_0 : i32, i32
  }
  func.func @transform_13(%arg0: i32) -> (i32, i32, i32) {
    %c0_i32 = arith.constant 0 : i32
    %c0_i32_0 = arith.constant 0 : i32
    %c0_i32_1 = arith.constant 0 : i32
    return %arg0, %c0_i32, %c0_i32_0 : i32, i32, i32
  }
}

</mosaic_0001>

<llo_original>
// kernel: lenet_forward.1
$region0: #{lenet_forward.1}
  #allocation0 [shape = 'u32[]', space=smem, size = 0x4, offset = 0x4, fixed_abs, tag = 'smem constant byte address 0x4 - core index']
  #allocation1 [shape = 'u32[72,128]{1,0:T(1,128)}', space=vmem, size = 0x9000, scoped, tag = 'internal scratch']
  %s0 = inlined_call_operand.vmem [shape: f32[2,8,256], index: 0, kind: input, shape index: {}]
  %s1 = inlined_call_operand.vmem [shape: bf16[8,32], index: 1, kind: input, shape index: {}]
  %s2 = inlined_call_operand.vmem [shape: f32[8,1], index: 2, kind: input, shape index: {}]
  %s3 = inlined_call_operand.vmem [shape: bf16[16,32], index: 3, kind: input, shape index: {}]
  %s4 = inlined_call_operand.vmem [shape: f32[16,1], index: 4, kind: input, shape index: {}]
  %s5 = inlined_call_operand.vmem [shape: bf16[256,144], index: 5, kind: input, shape index: {}]
  %s6 = inlined_call_operand.vmem [shape: f32[16,144], index: 6, kind: input, shape index: {}]
  %s7 = inlined_call_operand.vmem [shape: bf16[144,100], index: 7, kind: input, shape index: {}]
  %s8 = inlined_call_operand.vmem [shape: f32[1,100], index: 8, kind: input, shape index: {}]
  %s9 = inlined_call_operand.vmem [shape: bf16[100,20], index: 9, kind: input, shape index: {}]
  %s10 = inlined_call_operand.vmem [shape: f32[1,20], index: 10, kind: input, shape index: {}]
  %s11 = inlined_call_operand.vmem [shape: bf16[20,10], index: 11, kind: input, shape index: {}]
  %s12 = inlined_call_operand.vmem [shape: f32[1,10], index: 12, kind: input, shape index: {}]
  %s13 = inlined_call_operand.hbm [shape: f32[2,1,10], index: 13, kind: output, shape index: {}]
  %s14 = sld [smem:[#allocation0]]
  $region85: #{lenet_forward.1} parent=0
    _
  %s16 = ssub.s32 1, %s14
  %s17 = scalar_select 0, %s16, %s14
  $region1: #{lenet_forward.1} parent=0
    #allocation2 [shape = 'u8[1024]{0}', space=vmem, size = 0x400, scoped, tag = 'output window, operand 0']
    #allocation3 [shape = 's32[2]{0}', space=sflag, size = 0x8, scoped, tag = 'scoped memory for lenet_forward.1']
    %18 = vsyncpa [#allocation3], 0
    %s19 = scalar_lea.sflag [#allocation3], 1
    %20 = vsyncpa %s19, 0
    loop: start=0, step=1, limit=4
    $region2: #{lenet_forward.1} parent=1 // loop_pre_header
      _
    $region3: #{lenet_forward.1} parent=1 // loop_header
      %s22 = sphi 0, %s26
      %p23 = scmp.ge.s32.totalorder %s22, 4
      %s32 = sphi 0, %s34
      %s35 = sphi 0, %s32
      %s36 = sphi 0, %s35
      %s52 = sphi 0, %s36
      %s56 = sphi 0, %s56
      %s58 = sphi 0, %s56
      %s59 = sphi 0, %s58
      %s73 = sphi 0, %s59
      %s77 = sphi 0, %s77
      %s79 = sphi 0, %s77
      %s80 = sphi 0, %s79
      %s94 = sphi 0, %s80
      %s98 = sphi 0, %s98
      %s100 = sphi 0, %s98
      %s101 = sphi 0, %s100
      %s115 = sphi 0, %s101
      %s119 = sphi 0, %s119
      %s121 = sphi 0, %s119
      %s122 = sphi 0, %s121
      %s136 = sphi 0, %s122
      %s140 = sphi 0, %s140
      %s142 = sphi 0, %s140
      %s143 = sphi 0, %s142
      %s157 = sphi 0, %s143
      %s161 = sphi 0, %s161
      %s163 = sphi 0, %s161
      %s164 = sphi 0, %s163
      %s178 = sphi 0, %s164
      %s182 = sphi 0, %s182
      %s184 = sphi 0, %s182
      %s185 = sphi 0, %s184
      %s199 = sphi 0, %s185
      %s203 = sphi 0, %s203
      %s205 = sphi 0, %s203
      %s206 = sphi 0, %s205
      %s220 = sphi 0, %s206
      %s224 = sphi 0, %s224
      %s226 = sphi 0, %s224
      %s227 = sphi 0, %s226
      %s241 = sphi 0, %s227
      %s245 = sphi 0, %s245
      %s247 = sphi 0, %s245
      %s248 = sphi 0, %s247
      %s262 = sphi 0, %s248
      %s266 = sphi 0, %s266
      %s268 = sphi 0, %s266
      %s269 = sphi 0, %s268
      %s283 = sphi 0, %s269
      %s287 = sphi 0, %s287
      %s289 = sphi 0, %s287
      %s290 = sphi 0, %s289
      %s304 = sphi 0, %s290
      %s310 = sphi 0, %s312
      %s313 = sphi 0, %s310
      %s314 = sphi 0, %s313
      %s330 = sphi 0, %s314
    $region4: #{lenet_forward.1} parent=1 // loop_header_branch
      %25 = sbr.rel (%p23) target = $region8
    $region5: #{lenet_forward.1} parent=1 // loop_body
      %s27 = ssub.s32 %s22, 1
      %s28 = ssub.s32 %s22, 2
      %s29 = sadd.s32 %s22, 1
      %s30 = ssub.s32 %s22, %s29
      %p31 = scmp.eq.s32.totalorder %s30, 0
      %s33 = sadd.s32 %s32, 1
      %s34 = scalar_select %p31, %s32, %s33
      %p37 = pneg %p31
      %p38 = scmp.eq.s32.totalorder %s22, 1
      %p39 = por %p37, %p38
      %p40 = scmp.ne.s32.totalorder %s32, %s35
      %p41 = scmp.eq.s32.totalorder %s22, 0
      %p42 = por %p40, %p41
      %p43 = scmp.ne.s32.totalorder %s32, %s35
      %p44 = scmp.eq.s32.totalorder %s27, 1
      %p45 = por %p43, %p44
      %p46 = scmp.ne.s32.totalorder %s35, %s36
      %p47 = scmp.eq.s32.totalorder %s27, 0
      %p48 = por %p46, %p47
      %p49 = scmp.ne.s32.totalorder %s35, %s36
      %p50 = scmp.eq.s32.totalorder %s28, 1
      %p51 = por %p49, %p50
      %p53 = scmp.ne.s32.totalorder %s36, %s52
      %p54 = scmp.eq.s32.totalorder %s28, 0
      %p55 = por %p53, %p54
      %s57 = sadd.s32 %s56, 1
      %p60 = scmp.eq.s32.totalorder %s22, 1
      %p61 = scmp.ne.s32.totalorder %s56, %s58
      %p62 = scmp.eq.s32.totalorder %s22, 0
      %p63 = por %p61, %p62
      %p64 = scmp.ne.s32.totalorder %s56, %s58
      %p65 = scmp.eq.s32.totalorder %s27, 1
      %p66 = por %p64, %p65
      %p67 = scmp.ne.s32.totalorder %s58, %s59
      %p68 = scmp.eq.s32.totalorder %s27, 0
      %p69 = por %p67, %p68
      %p70 = scmp.ne.s32.totalorder %s58, %s59
      %p71 = scmp.eq.s32.totalorder %s28, 1
      %p72 = por %p70, %p71
      %p74 = scmp.ne.s32.totalorder %s59, %s73
      %p75 = scmp.eq.s32.totalorder %s28, 0
      %p76 = por %p74, %p75
      %s78 = sadd.s32 %s77, 1
      %p81 = scmp.eq.s32.totalorder %s22, 1
      %p82 = scmp.ne.s32.totalorder %s77, %s79
      %p83 = scmp.eq.s32.totalorder %s22, 0
      %p84 = por %p82, %p83
      %p85 = scmp.ne.s32.totalorder %s77, %s79
      %p86 = scmp.eq.s32.totalorder %s27, 1
      %p87 = por %p85, %p86
      %p88 = scmp.ne.s32.totalorder %s79, %s80
      %p89 = scmp.eq.s32.totalorder %s27, 0
      %p90 = por %p88, %p89
      %p91 = scmp.ne.s32.totalorder %s79, %s80
      %p92 = scmp.eq.s32.totalorder %s28, 1
      %p93 = por %p91, %p92
      %p95 = scmp.ne.s32.totalorder %s80, %s94
      %p96 = scmp.eq.s32.totalorder %s28, 0
      %p97 = por %p95, %p96
      %s99 = sadd.s32 %s98, 1
      %p102 = scmp.eq.s32.totalorder %s22, 1
      %p103 = scmp.ne.s32.totalorder %s98, %s100
      %p104 = scmp.eq.s32.totalorder %s22, 0
      %p105 = por %p103, %p104
      %p106 = scmp.ne.s32.totalorder %s98, %s100
      %p107 = scmp.eq.s32.totalorder %s27, 1
      %p108 = por %p106, %p107
      %p109 = scmp.ne.s32.totalorder %s100, %s101
      %p110 = scmp.eq.s32.totalorder %s27, 0
      %p111 = por %p109, %p110
      %p112 = scmp.ne.s32.totalorder %s100, %s101
      %p113 = scmp.eq.s32.totalorder %s28, 1
      %p114 = por %p112, %p113
      %p116 = scmp.ne.s32.totalorder %s101, %s115
      %p117 = scmp.eq.s32.totalorder %s28, 0
      %p118 = por %p116, %p117
      %s120 = sadd.s32 %s119, 1
      %p123 = scmp.eq.s32.totalorder %s22, 1
      %p124 = scmp.ne.s32.totalorder %s119, %s121
      %p125 = scmp.eq.s32.totalorder %s22, 0
      %p126 = por %p124, %p125
      %p127 = scmp.ne.s32.totalorder %s119, %s121
      %p128 = scmp.eq.s32.totalorder %s27, 1
      %p129 = por %p127, %p128
      %p130 = scmp.ne.s32.totalorder %s121, %s122
      %p131 = scmp.eq.s32.totalorder %s27, 0
      %p132 = por %p130, %p131
      %p133 = scmp.ne.s32.totalorder %s121, %s122
      %p134 = scmp.eq.s32.totalorder %s28, 1
      %p135 = por %p133, %p134
      %p137 = scmp.ne.s32.totalorder %s122, %s136
      %p138 = scmp.eq.s32.totalorder %s28, 0
      %p139 = por %p137, %p138
      %s141 = sadd.s32 %s140, 1
      %p144 = scmp.eq.s32.totalorder %s22, 1
      %p145 = scmp.ne.s32.totalorder %s140, %s142
      %p146 = scmp.eq.s32.totalorder %s22, 0
      %p147 = por %p145, %p146
      %p148 = scmp.ne.s32.totalorder %s140, %s142
      %p149 = scmp.eq.s32.totalorder %s27, 1
      %p150 = por %p148, %p149
      %p151 = scmp.ne.s32.totalorder %s142, %s143
      %p152 = scmp.eq.s32.totalorder %s27, 0
      %p153 = por %p151, %p152
      %p154 = scmp.ne.s32.totalorder %s142, %s143
      %p155 = scmp.eq.s32.totalorder %s28, 1
      %p156 = por %p154, %p155
      %p158 = scmp.ne.s32.totalorder %s143, %s157
      %p159 = scmp.eq.s32.totalorder %s28, 0
      %p160 = por %p158, %p159
      %s162 = sadd.s32 %s161, 1
      %p165 = scmp.eq.s32.totalorder %s22, 1
      %p166 = scmp.ne.s32.totalorder %s161, %s163
      %p167 = scmp.eq.s32.totalorder %s22, 0
      %p168 = por %p166, %p167
      %p169 = scmp.ne.s32.totalorder %s161, %s163
      %p170 = scmp.eq.s32.totalorder %s27, 1
      %p171 = por %p169, %p170
      %p172 = scmp.ne.s32.totalorder %s163, %s164
      %p173 = scmp.eq.s32.totalorder %s27, 0
      %p174 = por %p172, %p173
      %p175 = scmp.ne.s32.totalorder %s163, %s164
      %p176 = scmp.eq.s32.totalorder %s28, 1
      %p177 = por %p175, %p176
      %p179 = scmp.ne.s32.totalorder %s164, %s178
      %p180 = scmp.eq.s32.totalorder %s28, 0
      %p181 = por %p179, %p180
      %s183 = sadd.s32 %s182, 1
      %p186 = scmp.eq.s32.totalorder %s22, 1
      %p187 = scmp.ne.s32.totalorder %s182, %s184
      %p188 = scmp.eq.s32.totalorder %s22, 0
      %p189 = por %p187, %p188
      %p190 = scmp.ne.s32.totalorder %s182, %s184
      %p191 = scmp.eq.s32.totalorder %s27, 1
      %p192 = por %p190, %p191
      %p193 = scmp.ne.s32.totalorder %s184, %s185
      %p194 = scmp.eq.s32.totalorder %s27, 0
      %p195 = por %p193, %p194
      %p196 = scmp.ne.s32.totalorder %s184, %s185
      %p197 = scmp.eq.s32.totalorder %s28, 1
      %p198 = por %p196, %p197
      %p200 = scmp.ne.s32.totalorder %s185, %s199
      %p201 = scmp.eq.s32.totalorder %s28, 0
      %p202 = por %p200, %p201
      %s204 = sadd.s32 %s203, 1
      %p207 = scmp.eq.s32.totalorder %s22, 1
      %p208 = scmp.ne.s32.totalorder %s203, %s205
      %p209 = scmp.eq.s32.totalorder %s22, 0
      %p210 = por %p208, %p209
      %p211 = scmp.ne.s32.totalorder %s203, %s205
      %p212 = scmp.eq.s32.totalorder %s27, 1
      %p213 = por %p211, %p212
      %p214 = scmp.ne.s32.totalorder %s205, %s206
      %p215 = scmp.eq.s32.totalorder %s27, 0
      %p216 = por %p214, %p215
      %p217 = scmp.ne.s32.totalorder %s205, %s206
      %p218 = scmp.eq.s32.totalorder %s28, 1
      %p219 = por %p217, %p218
      %p221 = scmp.ne.s32.totalorder %s206, %s220
      %p222 = scmp.eq.s32.totalorder %s28, 0
      %p223 = por %p221, %p222
      %s225 = sadd.s32 %s224, 1
      %p228 = scmp.eq.s32.totalorder %s22, 1
      %p229 = scmp.ne.s32.totalorder %s224, %s226
      %p230 = scmp.eq.s32.totalorder %s22, 0
      %p231 = por %p229, %p230
      %p232 = scmp.ne.s32.totalorder %s224, %s226
      %p233 = scmp.eq.s32.totalorder %s27, 1
      %p234 = por %p232, %p233
      %p235 = scmp.ne.s32.totalorder %s226, %s227
      %p236 = scmp.eq.s32.totalorder %s27, 0
      %p237 = por %p235, %p236
      %p238 = scmp.ne.s32.totalorder %s226, %s227
      %p239 = scmp.eq.s32.totalorder %s28, 1
      %p240 = por %p238, %p239
      %p242 = scmp.ne.s32.totalorder %s227, %s241
      %p243 = scmp.eq.s32.totalorder %s28, 0
      %p244 = por %p242, %p243
      %s246 = sadd.s32 %s245, 1
      %p249 = scmp.eq.s32.totalorder %s22, 1
      %p250 = scmp.ne.s32.totalorder %s245, %s247
      %p251 = scmp.eq.s32.totalorder %s22, 0
      %p252 = por %p250, %p251
      %p253 = scmp.ne.s32.totalorder %s245, %s247
      %p254 = scmp.eq.s32.totalorder %s27, 1
      %p255 = por %p253, %p254
      %p256 = scmp.ne.s32.totalorder %s247, %s248
      %p257 = scmp.eq.s32.totalorder %s27, 0
      %p258 = por %p256, %p257
      %p259 = scmp.ne.s32.totalorder %s247, %s248
      %p260 = scmp.eq.s32.totalorder %s28, 1
      %p261 = por %p259, %p260
      %p263 = scmp.ne.s32.totalorder %s248, %s262
      %p264 = scmp.eq.s32.totalorder %s28, 0
      %p265 = por %p263, %p264
      %s267 = sadd.s32 %s266, 1
      %p270 = scmp.eq.s32.totalorder %s22, 1
      %p271 = scmp.ne.s32.totalorder %s266, %s268
      %p272 = scmp.eq.s32.totalorder %s22, 0
      %p273 = por %p271, %p272
      %p274 = scmp.ne.s32.totalorder %s266, %s268
      %p275 = scmp.eq.s32.totalorder %s27, 1
      %p276 = por %p274, %p275
      %p277 = scmp.ne.s32.totalorder %s268, %s269
      %p278 = scmp.eq.s32.totalorder %s27, 0
      %p279 = por %p277, %p278
      %p280 = scmp.ne.s32.totalorder %s268, %s269
      %p281 = scmp.eq.s32.totalorder %s28, 1
      %p282 = por %p280, %p281
      %p284 = scmp.ne.s32.totalorder %s269, %s283
      %p285 = scmp.eq.s32.totalorder %s28, 0
      %p286 = por %p284, %p285
      %s288 = sadd.s32 %s287, 1
      %p291 = scmp.eq.s32.totalorder %s22, 1
      %p292 = scmp.ne.s32.totalorder %s287, %s289
      %p293 = scmp.eq.s32.totalorder %s22, 0
      %p294 = por %p292, %p293
      %p295 = scmp.ne.s32.totalorder %s287, %s289
      %p296 = scmp.eq.s32.totalorder %s27, 1
      %p297 = por %p295, %p296
      %p298 = scmp.ne.s32.totalorder %s289, %s290
      %p299 = scmp.eq.s32.totalorder %s27, 0
      %p300 = por %p298, %p299
      %p301 = scmp.ne.s32.totalorder %s289, %s290
      %p302 = scmp.eq.s32.totalorder %s28, 1
      %p303 = por %p301, %p302
      %p305 = scmp.ne.s32.totalorder %s290, %s304
      %p306 = scmp.eq.s32.totalorder %s28, 0
      %p307 = por %p305, %p306
      %s308 = ssub.s32 %s22, %s29
      %p309 = scmp.eq.s32.totalorder %s308, 0
      %s311 = sadd.s32 %s310, 1
      %s312 = scalar_select %p309, %s310, %s311
      %p315 = pneg %p309
      %p316 = scmp.eq.s32.totalorder %s22, 1
      %p317 = por %p315, %p316
      %p318 = scmp.ne.s32.totalorder %s310, %s313
      %p319 = scmp.eq.s32.totalorder %s22, 0
      %p320 = por %p318, %p319
      %p321 = scmp.ne.s32.totalorder %s310, %s313
      %p322 = scmp.eq.s32.totalorder %s27, 1
      %p323 = por %p321, %p322
      %p324 = scmp.ne.s32.totalorder %s313, %s314
      %p325 = scmp.eq.s32.totalorder %s27, 0
      %p326 = por %p324, %p325
      %p327 = scmp.ne.s32.totalorder %s313, %s314
      %p328 = scmp.eq.s32.totalorder %s28, 1
      %p329 = por %p327, %p328
      %p331 = scmp.ne.s32.totalorder %s314, %s330
      %p332 = scmp.eq.s32.totalorder %s28, 0
      %p333 = por %p331, %p332
      %p334 = scmp.le.s32.totalorder 1, %s22
      %p335 = scmp.lt.s32.totalorder %s22, 3
      %p336 = pnand %p334, %p335
      %p337 = pneg %p336
      // Predicated region
      $region9: #{lenet_forward.1} parent=5 // pred_check
        _
      $region10: #{lenet_forward.1} parent=5 // pred_check_branch
        %339 = sbr.rel (%p336) target = $region12
      $region11: #{lenet_forward.1} parent=5 // pred_region
        %s340 = ssub.s32 %s22, 1
        // Predicated region
        $region13: #{lenet_forward.1} parent=11 // pred_check
          %p341 = pneg %p69
        $region14: #{lenet_forward.1} parent=11 // pred_check_branch
          %343 = sbr.rel (%p341) target = $region16
        $region15: #{lenet_forward.1} parent=11 // pred_region
          _
        $region16: #{lenet_forward.1} parent=11 // pred_fallthru
          _
        // Predicated region
        $region17: #{lenet_forward.1} parent=11 // pred_check
          %p344 = pneg %p90
        $region18: #{lenet_forward.1} parent=11 // pred_check_branch
          %346 = sbr.rel (%p344) target = $region20
        $region19: #{lenet_forward.1} parent=11 // pred_region
          _
        $region20: #{lenet_forward.1} parent=11 // pred_fallthru
          _
        // Predicated region
        $region21: #{lenet_forward.1} parent=11 // pred_check
          %p347 = pneg %p111
        $region22: #{lenet_forward.1} parent=11 // pred_check_branch
          %349 = sbr.rel (%p347) target = $region24
        $region23: #{lenet_forward.1} parent=11 // pred_region
          _
        $region24: #{lenet_forward.1} parent=11 // pred_fallthru
          _
        // Predicated region
        $region25: #{lenet_forward.1} parent=11 // pred_check
          %p350 = pneg %p132
        $region26: #{lenet_forward.1} parent=11 // pred_check_branch
          %352 = sbr.rel (%p350) target = $region28
        $region27: #{lenet_forward.1} parent=11 // pred_region
          _
        $region28: #{lenet_forward.1} parent=11 // pred_fallthru
          _
        // Predicated region
        $region29: #{lenet_forward.1} parent=11 // pred_check
          %p353 = pneg %p153
        $region30: #{lenet_forward.1} parent=11 // pred_check_branch
          %355 = sbr.rel (%p353) target = $region32
        $region31: #{lenet_forward.1} parent=11 // pred_region
          _
        $region32: #{lenet_forward.1} parent=11 // pred_fallthru
          _
        // Predicated region
        $region33: #{lenet_forward.1} parent=11 // pred_check
          %p356 = pneg %p174
        $region34: #{lenet_forward.1} parent=11 // pred_check_branch
          %358 = sbr.rel (%p356) target = $region36
        $region35: #{lenet_forward.1} parent=11 // pred_region
          _
        $region36: #{lenet_forward.1} parent=11 // pred_fallthru
          _
        // Predicated region
        $region37: #{lenet_forward.1} parent=11 // pred_check
          %p359 = pneg %p195
        $region38: #{lenet_forward.1} parent=11 // pred_check_branch
          %361 = sbr.rel (%p359) target = $region40
        $region39: #{lenet_forward.1} parent=11 // pred_region
          _
        $region40: #{lenet_forward.1} parent=11 // pred_fallthru
          _
        // Predicated region
        $region41: #{lenet_forward.1} parent=11 // pred_check
          %p362 = pneg %p216
        $region42: #{lenet_forward.1} parent=11 // pred_check_branch
          %364 = sbr.rel (%p362) target = $region44
        $region43: #{lenet_forward.1} parent=11 // pred_region
          _
        $region44: #{lenet_forward.1} parent=11 // pred_fallthru
          _
        // Predicated region
        $region45: #{lenet_forward.1} parent=11 // pred_check
          %p365 = pneg %p237
        $region46: #{lenet_forward.1} parent=11 // pred_check_branch
          %367 = sbr.rel (%p365) target = $region48
        $region47: #{lenet_forward.1} parent=11 // pred_region
          _
        $region48: #{lenet_forward.1} parent=11 // pred_fallthru
          _
        // Predicated region
        $region49: #{lenet_forward.1} parent=11 // pred_check
          %p368 = pneg %p258
        $region50: #{lenet_forward.1} parent=11 // pred_check_branch
          %370 = sbr.rel (%p368) target = $region52
        $region51: #{lenet_forward.1} parent=11 // pred_region
          _
        $region52: #{lenet_forward.1} parent=11 // pred_fallthru
          _
        // Predicated region
        $region53: #{lenet_forward.1} parent=11 // pred_check
          %p371 = pneg %p279
        $region54: #{lenet_forward.1} parent=11 // pred_check_branch
          %373 = sbr.rel (%p371) target = $region56
        $region55: #{lenet_forward.1} parent=11 // pred_region
          _
        $region56: #{lenet_forward.1} parent=11 // pred_fallthru
          _
        // Predicated region
        $region57: #{lenet_forward.1} parent=11 // pred_check
          %p374 = pneg %p300
        $region58: #{lenet_forward.1} parent=11 // pred_check_branch
          %376 = sbr.rel (%p374) target = $region60
        $region59: #{lenet_forward.1} parent=11 // pred_region
          _
        $region60: #{lenet_forward.1} parent=11 // pred_fallthru
          _
      $region12: #{lenet_forward.1} parent=5 // pred_fallthru
        _
      %p377 = scmp.lt.s32.totalorder %s22, 2
      // Predicated region
      $region61: #{lenet_forward.1} parent=5 // pred_check
        %p378 = pneg %p377
      $region62: #{lenet_forward.1} parent=5 // pred_check_branch
        %380 = sbr.rel (%p378) target = $region64
      $region63: #{lenet_forward.1} parent=5 // pred_region
        // Predicated region
        $region65: #{lenet_forward.1} parent=63 // pred_check
          %p381 = pneg %p42
        $region66: #{lenet_forward.1} parent=63 // pred_check_branch
          %383 = sbr.rel (%p381) target = $region68
        $region67: #{lenet_forward.1} parent=63 // pred_region
          %p384 = scmp.lt.s32.totalorder %s22, 1
          %s385 = scalar_select %p384, %s22, 1
          %s386 = smul.addr %s385, 2
          %s387 = smul.addr %s386, 8
          %s388 = scalar_lea.vmem %s0, %s387
        $region68: #{lenet_forward.1} parent=63 // pred_fallthru
          _
      $region64: #{lenet_forward.1} parent=5 // pred_fallthru
        _
      %p389 = scmp.le.s32.totalorder 1, %s22
      %p390 = scmp.lt.s32.totalorder %s22, 3
      %p391 = pnand %p389, %p390
      %p392 = pneg %p391
      // Predicated region
      $region69: #{lenet_forward.1} parent=5 // pred_check
        _
      $region70: #{lenet_forward.1} parent=5 // pred_check_branch
        %394 = sbr.rel (%p391) target = $region72
      $region71: #{lenet_forward.1} parent=5 // pred_region
        %s395 = ssub.s32 %s22, 1
        %p396 = scmp.lt.s32.totalorder %s27, 1
        %s397 = scalar_select %p396, %s27, 1
        %s398 = smul.addr %s397, 2
        %s399 = smul.addr %s398, 8
        %s400 = scalar_lea.vmem %s0, %s399
        %p401 = pneg %p48
        %p402 = pneg %p45
        %p403 = pneg %p69
        %p404 = pneg %p66
        %p405 = pneg %p90
        %p406 = pneg %p87
        %p407 = pneg %p111
        %p408 = pneg %p108
        %p409 = pneg %p132
        %p410 = pneg %p129
        %p411 = pneg %p153
        %p412 = pneg %p150
        %p413 = pneg %p174
        %p414 = pneg %p171
        %p415 = pneg %p195
        %p416 = pneg %p192
        %p417 = pneg %p216
        %p418 = pneg %p213
        %p419 = pneg %p237
        %p420 = pneg %p234
        %p421 = pneg %p258
        %p422 = pneg %p255
        %p423 = pneg %p279
        %p424 = pneg %p276
        %p425 = pneg %p300
        %p426 = pneg %p297
        %p427 = pneg %p326
        %p428 = pneg %p323
        %s429 = sand.u32 %s313, 1
        %s430 = scalar_lea.sflag [#allocation3], %s429
        %s431 = sand.u32 %s313, 1
        %s432 = scalar_lea.vmem [#allocation2], %s431
        %p433 = scmp.lt.s32.totalorder %s27, 1
        %s434 = scalar_select %p433, %s27, 1
        %s435 = smul.addr %s434, 2
        %s436 = smul.addr %s435, 8
        %s437 = scalar_lea.vmem %s0, %s436
        %v439 = vld [vmem:[%s437] sm:$0xff]
        %v440 = vld [vmem:[%s437 + $0x8] sm:$0xff]
        %441 = vrot.lane.b32.xlu0 %v439, 127
        %v442 = vpop.permute.xlu0 %441
        %443 = vrot.lane.b32.xlu0 %v440, 127
        %v444 = vpop.permute.xlu0 %443
        %v445 = vlaneseq
        %v446 = vand.u32 %v445, 127
        %vm447 = vcmp.lt.s32.totalorder %v446, 127
        %v448 = vsel %vm447, %v442, %v444
        %v449 = vsel %vm447, %v444, %v442
        %450 = vrot.lane.b32.xlu0 %v439, 112
        %v451 = vpop.permute.xlu0 %450
        %452 = vrot.lane.b32.xlu0 %v440, 112
        %v453 = vpop.permute.xlu0 %452
        %vm454 = vcmp.lt.s32.totalorder %v446, 112
        %v455 = vsel %vm454, %v451, %v453
        %v456 = vsel %vm454, %v453, %v451
        %457 = vrot.lane.b32.xlu0 %v439, 111
        %v458 = vpop.permute.xlu0 %457
        %459 = vrot.lane.b32.xlu0 %v440, 111
        %v460 = vpop.permute.xlu0 %459
        %vm461 = vcmp.lt.s32.totalorder %v446, 111
        %v462 = vsel %vm461, %v458, %v460
        %v463 = vsel %vm461, %v460, %v458
        %v464 = vpack.c.bf16 %v448, %v439
        %v465 = vpack.c.bf16 %v449, %v440
        %v466 = vpack.c.bf16 %v462, %v455
        %v467 = vpack.c.bf16 %v463, %v456
        %v468 = vld [vmem:[%s1] sm:$0xf]
        %v469 = vld [vmem:[%s2] sm:$0xff]
        %471 = vset.pattern.permute.xlu0 0
        %472 = vperm.xlu0 %471, %v469
        %v473 = vpop.permute.xlu0 %472
        %vm475 = vcmask 261120
        %v477 = vsel %vm475, %v468, 0
        %479 = vmatpush.bf16.msra.mxu0 0
        %480 = vmatpush.bf16.msra.mxu0 0
        %481 = vmatpush.bf16.msra.mxu0 0
        %482 = vmatpush.bf16.msra.mxu0 0
        %483 = vmatpush.bf16.msra.mxu0 0
        %484 = vmatpush.bf16.msra.mxu0 0
        %485 = vmatpush.bf16.msra.mxu0 %v466
        %486 = vmatpush.bf16.msra.mxu0 %v464
        %487 = vmatmul.bf16.gmra.mxu0 %v477
        %v488 = vpop.f32.mrf.mxu0
        %v489 = vadd.f32 %v473, %v488
        %v490 = vpop.f32.mrf.mxu0
        %491 = vdwg.mxu0
        %492 = vmatpush.bf16.msra.mxu0 0
        %493 = vmatpush.bf16.msra.mxu0 0
        %494 = vmatpush.bf16.msra.mxu0 0
        %495 = vmatpush.bf16.msra.mxu0 0
        %496 = vmatpush.bf16.msra.mxu0 0
        %497 = vmatpush.bf16.msra.mxu0 0
        %498 = vmatpush.bf16.msra.mxu0 %v467
        %499 = vmatpush.bf16.msra.mxu0 %v465
        %500 = vmatmul.bf16.gmra.mxu0 %v477
        %v501 = vpop.f32.mrf.mxu0
        %v502 = vadd.f32 %v473, %v501
        %v503 = vpop.f32.mrf.mxu0
        %504 = vdwg.mxu0
        %v505 = vmax.f32 %v489, 0.0
        %v506 = vmax.f32 %v502, 0.0
        %507 = vrot.lane.b32.xlu0 %v505, 127
        %v508 = vpop.permute.xlu0 %507
        %509 = vrot.lane.b32.xlu0 %v506, 127
        %v510 = vpop.permute.xlu0 %509
        %v511 = vsel %vm447, %v508, %v510
        %v512 = vsel %vm447, %v510, %v508
        %v513 = vmax.f32 %v505, %v511
        %v514 = vmax.f32 %v506, %v512
        %515 = vrot.lane.b32.xlu0 %v505, 112
        %v516 = vpop.permute.xlu0 %515
        %517 = vrot.lane.b32.xlu0 %v506, 112
        %v518 = vpop.permute.xlu0 %517
        %v519 = vsel %vm454, %v516, %v518
        %v520 = vsel %vm454, %v518, %v516
        %v521 = vmax.f32 %v513, %v519
        %v522 = vmax.f32 %v514, %v520
        %523 = vrot.lane.b32.xlu0 %v505, 111
        %v524 = vpop.permute.xlu0 %523
        %525 = vrot.lane.b32.xlu0 %v506, 111
        %v526 = vpop.permute.xlu0 %525
        %v527 = vsel %vm461, %v524, %v526
        %v528 = vsel %vm461, %v526, %v524
        %v529 = vmax.f32 %v521, %v527
        %v530 = vmax.f32 %v522, %v528
        %531 = vrot.lane.b32.xlu0 %v529, 126
        %v532 = vpop.permute.xlu0 %531
        %533 = vrot.lane.b32.xlu0 %v530, 126
        %v534 = vpop.permute.xlu0 %533
        %vm535 = vcmp.lt.s32.totalorder %v446, 126
        %v536 = vsel %vm535, %v532, %v534
        %v537 = vsel %vm535, %v534, %v532
        %538 = vrot.lane.b32.xlu0 %v529, 96
        %v539 = vpop.permute.xlu0 %538
        %540 = vrot.lane.b32.xlu0 %v530, 96
        %v541 = vpop.permute.xlu0 %540
        %vm542 = vcmp.lt.s32.totalorder %v446, 96
        %v543 = vsel %vm542, %v539, %v541
        %v544 = vsel %vm542, %v541, %v539
        %545 = vrot.lane.b32.xlu0 %v529, 94
        %v546 = vpop.permute.xlu0 %545
        %547 = vrot.lane.b32.xlu0 %v530, 94
        %v548 = vpop.permute.xlu0 %547
        %vm549 = vcmp.lt.s32.totalorder %v446, 94
        %v550 = vsel %vm549, %v546, %v548
        %v551 = vsel %vm549, %v548, %v546
        %v552 = vpack.c.bf16 %v536, %v529
        %v553 = vpack.c.bf16 %v537, %v530
        %v554 = vpack.c.bf16 %v550, %v543
        %v555 = vpack.c.bf16 %v551, %v544
        %v556 = vld [vmem:[%s3] sm:$0xf]
        %v557 = vld [vmem:[%s3 + $0x4] sm:$0xf]
        %v558 = vld [vmem:[%s4] sm:$0xff]
        %v559 = vld [vmem:[%s4 + $0x8] sm:$0xff]
        %561 = vset.pattern.permute.xlu0 0
        %562 = vperm.xlu0 %561, %v558
        %v563 = vpop.permute.xlu0 %562
        %566 = vset.pattern.permute.xlu0 0
        %567 = vperm.xlu0 %566, %v559
        %v568 = vpop.permute.xlu0 %567
        %v572 = vunpack.c.l.b16 %v556
        %v573 = vunpack.c.l.b16 %v557
        %v574 = vpack.c.b16 %v573, %v572
        %v576 = vsel %vm475, %v574, 0
        %578 = vmatpush.bf16.msra.mxu0 0
        %579 = vmatpush.bf16.msra.mxu0 0
        %580 = vmatpush.bf16.msra.mxu0 0
        %581 = vmatpush.bf16.msra.mxu0 0
        %582 = vmatpush.bf16.msra.mxu0 0
        %583 = vmatpush.bf16.msra.mxu0 0
        %584 = vmatpush.bf16.msra.mxu0 %v554
        %585 = vmatpush.bf16.msra.mxu0 %v552
        %586 = vmatmul.bf16.gmra.mxu0 %v576
        %v587 = vpop.f32.mrf.mxu0
        %v588 = vadd.f32 %v563, %v587
        %v589 = vpop.f32.mrf.mxu0
        %v590 = vadd.f32 %v568, %v589
        %591 = vdwg.mxu0
        %592 = vmatpush.bf16.msra.mxu0 0
        %593 = vmatpush.bf16.msra.mxu0 0
        %594 = vmatpush.bf16.msra.mxu0 0
        %595 = vmatpush.bf16.msra.mxu0 0
        %596 = vmatpush.bf16.msra.mxu0 0
        %597 = vmatpush.bf16.msra.mxu0 0
        %598 = vmatpush.bf16.msra.mxu0 %v555
        %599 = vmatpush.bf16.msra.mxu0 %v553
        %600 = vmatmul.bf16.gmra.mxu0 %v576
        %v601 = vpop.f32.mrf.mxu0
        %v602 = vadd.f32 %v563, %v601
        %v603 = vpop.f32.mrf.mxu0
        %v604 = vadd.f32 %v568, %v603
        %605 = vdwg.mxu0
        %v606 = vmax.f32 %v588, 0.0
        %v607 = vmax.f32 %v602, 0.0
        %v608 = vmax.f32 %v590, 0.0
        %v609 = vmax.f32 %v604, 0.0
        %610 = vrot.lane.b32.xlu0 %v606, 126
        %v611 = vpop.permute.xlu0 %610
        %612 = vrot.lane.b32.xlu0 %v608, 126
        %v613 = vpop.permute.xlu0 %612
        %614 = vrot.lane.b32.xlu0 %v607, 126
        %v615 = vpop.permute.xlu0 %614
        %616 = vrot.lane.b32.xlu0 %v609, 126
        %v617 = vpop.permute.xlu0 %616
        %v618 = vsel %vm535, %v611, %v615
        %v619 = vsel %vm535, %v613, %v617
        %v620 = vsel %vm535, %v615, %v611
        %v621 = vsel %vm535, %v617, %v613
        %v622 = vmax.f32 %v606, %v618
        %v623 = vmax.f32 %v607, %v620
        %v624 = vmax.f32 %v608, %v619
        %v625 = vmax.f32 %v609, %v621
        %626 = vrot.lane.b32.xlu0 %v606, 96
        %v627 = vpop.permute.xlu0 %626
        %628 = vrot.lane.b32.xlu0 %v608, 96
        %v629 = vpop.permute.xlu0 %628
        %630 = vrot.lane.b32.xlu0 %v607, 96
        %v631 = vpop.permute.xlu0 %630
        %632 = vrot.lane.b32.xlu0 %v609, 96
        %v633 = vpop.permute.xlu0 %632
        %v634 = vsel %vm542, %v627, %v631
        %v635 = vsel %vm542, %v629, %v633
        %v636 = vsel %vm542, %v631, %v627
        %v637 = vsel %vm542, %v633, %v629
        %v638 = vmax.f32 %v622, %v634
        %v639 = vmax.f32 %v623, %v636
        %v640 = vmax.f32 %v624, %v635
        %v641 = vmax.f32 %v625, %v637
        %642 = vrot.lane.b32.xlu0 %v606, 94
        %v643 = vpop.permute.xlu0 %642
        %644 = vrot.lane.b32.xlu0 %v608, 94
        %v645 = vpop.permute.xlu0 %644
        %646 = vrot.lane.b32.xlu0 %v607, 94
        %v647 = vpop.permute.xlu0 %646
        %648 = vrot.lane.b32.xlu0 %v609, 94
        %v649 = vpop.permute.xlu0 %648
        %v650 = vsel %vm549, %v643, %v647
        %v651 = vsel %vm549, %v645, %v649
        %v652 = vsel %vm549, %v647, %v643
        %v653 = vsel %vm549, %v649, %v645
        %v654 = vmax.f32 %v638, %v650
        %v655 = vmax.f32 %v639, %v652
        %v656 = vmax.f32 %v640, %v651
        %v657 = vmax.f32 %v641, %v653
        %v658 = vpack.c.bf16 %v656, %v654
        %v659 = vpack.c.bf16 %v657, %v655
        %v660 = vld [vmem:[%s5] sm:$0xff]
        %v661 = vld [vmem:[%s5 + $0x8] sm:$0xff]
        %v662 = vld [vmem:[%s5 + $0x10] sm:$0xff]
        %v663 = vld [vmem:[%s5 + $0x18] sm:$0xff]
        %v664 = vld [vmem:[%s5 + $0x20] sm:$0xff]
        %v665 = vld [vmem:[%s5 + $0x28] sm:$0xff]
        %v666 = vld [vmem:[%s5 + $0x30] sm:$0xff]
        %v667 = vld [vmem:[%s5 + $0x38] sm:$0xff]
        %v668 = vld [vmem:[%s5 + $0x40] sm:$0xff]
        %v669 = vld [vmem:[%s5 + $0x48] sm:$0xff]
        %v670 = vld [vmem:[%s5 + $0x50] sm:$0xff]
        %v671 = vld [vmem:[%s5 + $0x58] sm:$0xff]
        %v672 = vld [vmem:[%s5 + $0x60] sm:$0xff]
        %v673 = vld [vmem:[%s5 + $0x68] sm:$0xff]
        %v674 = vld [vmem:[%s5 + $0x70] sm:$0xff]
        %v675 = vld [vmem:[%s5 + $0x78] sm:$0xff]
        %v676 = vld [vmem:[%s5 + $0x80] sm:$0xff]
        %v677 = vld [vmem:[%s5 + $0x88] sm:$0xff]
        %v678 = vld [vmem:[%s5 + $0x90] sm:$0xff]
        %v679 = vld [vmem:[%s5 + $0x98] sm:$0xff]
        %v680 = vld [vmem:[%s5 + $0xa0] sm:$0xff]
        %v681 = vld [vmem:[%s5 + $0xa8] sm:$0xff]
        %v682 = vld [vmem:[%s5 + $0xb0] sm:$0xff]
        %v683 = vld [vmem:[%s5 + $0xb8] sm:$0xff]
        %v684 = vld [vmem:[%s5 + $0xc0] sm:$0xff]
        %v685 = vld [vmem:[%s5 + $0xc8] sm:$0xff]
        %v686 = vld [vmem:[%s5 + $0xd0] sm:$0xff]
        %v687 = vld [vmem:[%s5 + $0xd8] sm:$0xff]
        %v688 = vld [vmem:[%s5 + $0xe0] sm:$0xff]
        %v689 = vld [vmem:[%s5 + $0xe8] sm:$0xff]
        %v690 = vld [vmem:[%s5 + $0xf0] sm:$0xff]
        %v691 = vld [vmem:[%s5 + $0xf8] sm:$0xff]
        %v724 = vunpack.c.l.b16 %v660
        %v725 = vunpack.c.h.b16 %v660
        %v726 = vunpack.c.l.b16 %v661
        %v727 = vunpack.c.h.b16 %v661
        %v728 = vunpack.c.l.b16 %v662
        %v729 = vunpack.c.h.b16 %v662
        %v730 = vunpack.c.l.b16 %v663
        %v731 = vunpack.c.h.b16 %v663
        %v732 = vunpack.c.l.b16 %v664
        %v733 = vunpack.c.h.b16 %v664
        %v734 = vunpack.c.l.b16 %v665
        %v735 = vunpack.c.h.b16 %v665
        %v736 = vunpack.c.l.b16 %v666
        %v737 = vunpack.c.h.b16 %v666
        %v738 = vunpack.c.l.b16 %v667
        %v739 = vunpack.c.h.b16 %v667
        %v740 = vunpack.c.l.b16 %v668
        %v741 = vunpack.c.h.b16 %v668
        %v742 = vunpack.c.l.b16 %v669
        %v743 = vunpack.c.h.b16 %v669
        %v744 = vunpack.c.l.b16 %v670
        %v745 = vunpack.c.h.b16 %v670
        %v746 = vunpack.c.l.b16 %v671
        %v747 = vunpack.c.h.b16 %v671
        %v748 = vunpack.c.l.b16 %v672
        %v749 = vunpack.c.h.b16 %v672
        %v750 = vunpack.c.l.b16 %v673
        %v751 = vunpack.c.h.b16 %v673
        %v752 = vunpack.c.l.b16 %v674
        %v753 = vunpack.c.h.b16 %v674
        %v754 = vunpack.c.l.b16 %v675
        %v755 = vunpack.c.h.b16 %v675
        %v756 = vunpack.c.l.b16 %v676
        %v757 = vunpack.c.h.b16 %v676
        %v758 = vunpack.c.l.b16 %v677
        %v759 = vunpack.c.h.b16 %v677
        %v760 = vunpack.c.l.b16 %v678
        %v761 = vunpack.c.h.b16 %v678
        %v762 = vunpack.c.l.b16 %v679
        %v763 = vunpack.c.h.b16 %v679
        %v764 = vunpack.c.l.b16 %v680
        %v765 = vunpack.c.h.b16 %v680
        %v766 = vunpack.c.l.b16 %v681
        %v767 = vunpack.c.h.b16 %v681
        %v768 = vunpack.c.l.b16 %v682
        %v769 = vunpack.c.h.b16 %v682
        %v770 = vunpack.c.l.b16 %v683
        %v771 = vunpack.c.h.b16 %v683
        %v772 = vunpack.c.l.b16 %v684
        %v773 = vunpack.c.h.b16 %v684
        %v774 = vunpack.c.l.b16 %v685
        %v775 = vunpack.c.h.b16 %v685
        %v776 = vunpack.c.l.b16 %v686
        %v777 = vunpack.c.h.b16 %v686
        %v778 = vunpack.c.l.b16 %v687
        %v779 = vunpack.c.h.b16 %v687
        %v780 = vunpack.c.l.b16 %v688
        %v781 = vunpack.c.h.b16 %v688
        %v782 = vunpack.c.l.b16 %v689
        %v783 = vunpack.c.h.b16 %v689
        %v784 = vunpack.c.l.b16 %v690
        %v785 = vunpack.c.h.b16 %v690
        %v786 = vunpack.c.l.b16 %v691
        %v787 = vunpack.c.h.b16 %v691
        %v788 = vpack.c.b16 %v726, %v724
        %v789 = vpack.c.b16 %v727, %v725
        %v790 = vpack.c.b16 %v730, %v728
        %v791 = vpack.c.b16 %v731, %v729
        %v792 = vpack.c.b16 %v734, %v732
        %v793 = vpack.c.b16 %v735, %v733
        %v794 = vpack.c.b16 %v738, %v736
        %v795 = vpack.c.b16 %v739, %v737
        %v796 = vpack.c.b16 %v742, %v740
        %v797 = vpack.c.b16 %v743, %v741
        %v798 = vpack.c.b16 %v746, %v744
        %v799 = vpack.c.b16 %v747, %v745
        %v800 = vpack.c.b16 %v750, %v748
        %v801 = vpack.c.b16 %v751, %v749
        %v802 = vpack.c.b16 %v754, %v752
        %v803 = vpack.c.b16 %v755, %v753
        %v804 = vpack.c.b16 %v758, %v756
        %v805 = vpack.c.b16 %v759, %v757
        %v806 = vpack.c.b16 %v762, %v760
        %v807 = vpack.c.b16 %v763, %v761
        %v808 = vpack.c.b16 %v766, %v764
        %v809 = vpack.c.b16 %v767, %v765
        %v810 = vpack.c.b16 %v770, %v768
        %v811 = vpack.c.b16 %v771, %v769
        %v812 = vpack.c.b16 %v774, %v772
        %v813 = vpack.c.b16 %v775, %v773
        %v814 = vpack.c.b16 %v778, %v776
        %v815 = vpack.c.b16 %v779, %v777
        %v816 = vpack.c.b16 %v782, %v780
        %v817 = vpack.c.b16 %v783, %v781
        %v818 = vpack.c.b16 %v786, %v784
        %v819 = vpack.c.b16 %v787, %v785
        %852 = vmatpush.bf16.msra.mxu0 %v802
        %853 = vmatpush.bf16.msra.mxu0 %v800
        %854 = vmatpush.bf16.msra.mxu0 %v798
        %855 = vmatpush.bf16.msra.mxu0 %v796
        %856 = vmatpush.bf16.msra.mxu0 %v794
        %857 = vmatpush.bf16.msra.mxu0 %v792
        %858 = vmatpush.bf16.msra.mxu0 %v790
        %859 = vmatpush.bf16.msra.mxu0 %v788
        %860 = vmatmul.bf16.gmra.mxu0 %v658
        %v861 = vpop.f32.mrf.mxu0
        %v862 = vadd.f32 0.0, %v861
        %v863 = vpop.f32.mrf.mxu0
        %v864 = vadd.f32 0.0, %v863
        %865 = vdwg.mxu0
        %866 = vmatpush.bf16.msra.mxu0 %v818
        %867 = vmatpush.bf16.msra.mxu0 %v816
        %868 = vmatpush.bf16.msra.mxu0 %v814
        %869 = vmatpush.bf16.msra.mxu0 %v812
        %870 = vmatpush.bf16.msra.mxu0 %v810
        %871 = vmatpush.bf16.msra.mxu0 %v808
        %872 = vmatpush.bf16.msra.mxu0 %v806
        %873 = vmatpush.bf16.msra.mxu0 %v804
        %874 = vmatmul.bf16.gmra.mxu0 %v659
        %v875 = vpop.f32.mrf.mxu0
        %v876 = vadd.f32 %v862, %v875
        %v877 = vpop.f32.mrf.mxu0
        %v878 = vadd.f32 %v864, %v877
        %879 = vdwg.mxu0
        %880 = vmatpush.bf16.msra.mxu0 %v803
        %881 = vmatpush.bf16.msra.mxu0 %v801
        %882 = vmatpush.bf16.msra.mxu0 %v799
        %883 = vmatpush.bf16.msra.mxu0 %v797
        %884 = vmatpush.bf16.msra.mxu0 %v795
        %885 = vmatpush.bf16.msra.mxu0 %v793
        %886 = vmatpush.bf16.msra.mxu0 %v791
        %887 = vmatpush.bf16.msra.mxu0 %v789
        %888 = vmatmul.bf16.gmra.mxu0 %v658
        %v889 = vpop.f32.mrf.mxu0
        %v890 = vadd.f32 0.0, %v889
        %v891 = vpop.f32.mrf.mxu0
        %v892 = vadd.f32 0.0, %v891
        %893 = vdwg.mxu0
        %894 = vmatpush.bf16.msra.mxu0 %v819
        %895 = vmatpush.bf16.msra.mxu0 %v817
        %896 = vmatpush.bf16.msra.mxu0 %v815
        %897 = vmatpush.bf16.msra.mxu0 %v813
        %898 = vmatpush.bf16.msra.mxu0 %v811
        %899 = vmatpush.bf16.msra.mxu0 %v809
        %900 = vmatpush.bf16.msra.mxu0 %v807
        %901 = vmatpush.bf16.msra.mxu0 %v805
        %902 = vmatmul.bf16.gmra.mxu0 %v659
        %v903 = vpop.f32.mrf.mxu0
        %v904 = vadd.f32 %v890, %v903
        %v905 = vpop.f32.mrf.mxu0
        %v906 = vadd.f32 %v892, %v905
        %907 = vdwg.mxu0
        %v908 = vld [vmem:[%s6] sm:$0xff]
        %v909 = vld [vmem:[%s6 + $0x8] sm:$0xff]
        %v910 = vld [vmem:[%s6 + $0x10] sm:$0xff]
        %v911 = vld [vmem:[%s6 + $0x18] sm:$0xff]
        %v912 = vmul.f32 %v876, %v908
        %v913 = vmul.f32 %v904, %v909
        %v914 = vmul.f32 %v878, %v910
        %v915 = vmul.f32 %v906, %v911
        %vm916 = vcmask 130048
        %v918 = vsel %vm916, 1.0, 0
        %920 = vmatpush.msra.mxu0 0.0
        %921 = vmatpush.msra.mxu0 0.0
        %922 = vmatpush.msra.mxu0 0.0
        %923 = vmatpush.msra.mxu0 0.0
        %924 = vmatpush.msra.mxu0 0.0
        %925 = vmatpush.msra.mxu0 0.0
        %926 = vmatpush.msra.mxu0 0.0
        %927 = vmatpush.msra.mxu0 0.0
        %928 = vmatpush.msra.mxu0 0.0
        %929 = vmatpush.msra.mxu0 0.0
        %930 = vmatpush.msra.mxu0 0.0
        %931 = vmatpush.msra.mxu0 0.0
        %932 = vmatpush.msra.mxu0 0.0
        %933 = vmatpush.msra.mxu0 0.0
        %934 = vmatpush.msra.mxu0 %v914
        %935 = vmatpush.msra.mxu0 %v912
        %936 = vmatmul.f32.gmra.mxu0 %v918
        %v937 = vpop.f32.mrf.mxu0
        %v938 = vadd.f32 0.0, %v937
        %939 = vdwg.mxu0
        %940 = vmatpush.msra.mxu0 0.0
        %941 = vmatpush.msra.mxu0 0.0
        %942 = vmatpush.msra.mxu0 0.0
        %943 = vmatpush.msra.mxu0 0.0
        %944 = vmatpush.msra.mxu0 0.0
        %945 = vmatpush.msra.mxu0 0.0
        %946 = vmatpush.msra.mxu0 0.0
        %947 = vmatpush.msra.mxu0 0.0
        %948 = vmatpush.msra.mxu0 0.0
        %949 = vmatpush.msra.mxu0 0.0
        %950 = vmatpush.msra.mxu0 0.0
        %951 = vmatpush.msra.mxu0 0.0
        %952 = vmatpush.msra.mxu0 0.0
        %953 = vmatpush.msra.mxu0 0.0
        %954 = vmatpush.msra.mxu0 %v915
        %955 = vmatpush.msra.mxu0 %v913
        %956 = vmatmul.f32.gmra.mxu0 %v918
        %v957 = vpop.f32.mrf.mxu0
        %v958 = vadd.f32 0.0, %v957
        %959 = vdwg.mxu0
        %v960 = vpack.c.bf16 %v938, %v938
        %v961 = vpack.c.bf16 %v958, %v958
        %v962 = vld [vmem:[%s7] sm:$0xf]
        %v963 = vld [vmem:[%s7 + $0x4] sm:$0xf]
        %v964 = vld [vmem:[%s7 + $0x8] sm:$0xf]
        %v965 = vld [vmem:[%s7 + $0xc] sm:$0xf]
        %v966 = vld [vmem:[%s7 + $0x10] sm:$0xf]
        %v967 = vld [vmem:[%s7 + $0x14] sm:$0xf]
        %v968 = vld [vmem:[%s7 + $0x18] sm:$0xf]
        %v969 = vld [vmem:[%s7 + $0x1c] sm:$0xf]
        %v970 = vld [vmem:[%s7 + $0x20] sm:$0xf]
        %v971 = vld [vmem:[%s7 + $0x24] sm:$0xf]
        %v972 = vld [vmem:[%s7 + $0x28] sm:$0xf]
        %v973 = vld [vmem:[%s7 + $0x2c] sm:$0xf]
        %v974 = vld [vmem:[%s7 + $0x30] sm:$0xf]
        %v975 = vld [vmem:[%s7 + $0x34] sm:$0xf]
        %v976 = vld [vmem:[%s7 + $0x38] sm:$0xf]
        %v977 = vld [vmem:[%s7 + $0x3c] sm:$0xf]
        %v978 = vld [vmem:[%s7 + $0x40] sm:$0xf]
        %v979 = vld [vmem:[%s7 + $0x44] sm:$0xf]
        %v980 = vld [vmem:[%s8] sm:$0x1]
        %v999 = vunpack.c.l.b16 %v962
        %v1000 = vunpack.c.l.b16 %v963
        %v1001 = vunpack.c.l.b16 %v964
        %v1002 = vunpack.c.l.b16 %v965
        %v1003 = vunpack.c.l.b16 %v966
        %v1004 = vunpack.c.l.b16 %v967
        %v1005 = vunpack.c.l.b16 %v968
        %v1006 = vunpack.c.l.b16 %v969
        %v1007 = vunpack.c.l.b16 %v970
        %v1008 = vunpack.c.l.b16 %v971
        %v1009 = vunpack.c.l.b16 %v972
        %v1010 = vunpack.c.l.b16 %v973
        %v1011 = vunpack.c.l.b16 %v974
        %v1012 = vunpack.c.l.b16 %v975
        %v1013 = vunpack.c.l.b16 %v976
        %v1014 = vunpack.c.l.b16 %v977
        %v1015 = vunpack.c.l.b16 %v978
        %v1016 = vunpack.c.l.b16 %v979
        %v1017 = vpack.c.b16 %v1000, %v999
        %v1018 = vpack.c.b16 %v1002, %v1001
        %v1019 = vpack.c.b16 %v1004, %v1003
        %v1020 = vpack.c.b16 %v1006, %v1005
        %v1021 = vpack.c.b16 %v1008, %v1007
        %v1022 = vpack.c.b16 %v1010, %v1009
        %v1023 = vpack.c.b16 %v1012, %v1011
        %v1024 = vpack.c.b16 %v1014, %v1013
        %v1025 = vpack.c.b16 %v1016, %v1015
        %v1036 = vsel %vm916, %v961, 0
        %1038 = vmatpush.bf16.msra.mxu0 %v1024
        %1039 = vmatpush.bf16.msra.mxu0 %v1023
        %1040 = vmatpush.bf16.msra.mxu0 %v1022
        %1041 = vmatpush.bf16.msra.mxu0 %v1021
        %1042 = vmatpush.bf16.msra.mxu0 %v1020
        %1043 = vmatpush.bf16.msra.mxu0 %v1019
        %1044 = vmatpush.bf16.msra.mxu0 %v1018
        %1045 = vmatpush.bf16.msra.mxu0 %v1017
        %1046 = vmatmul.bf16.gmra.mxu0 %v960
        %v1047 = vpop.f32.mrf.mxu0
        %v1048 = vadd.f32 %v980, %v1047
        %v1049 = vpop.f32.mrf.mxu0
        %1050 = vdwg.mxu0
        %1051 = vmatpush.bf16.msra.mxu0 0
        %1052 = vmatpush.bf16.msra.mxu0 0
        %1053 = vmatpush.bf16.msra.mxu0 0
        %1054 = vmatpush.bf16.msra.mxu0 0
        %1055 = vmatpush.bf16.msra.mxu0 0
        %1056 = vmatpush.bf16.msra.mxu0 0
        %1057 = vmatpush.bf16.msra.mxu0 0
        %1058 = vmatpush.bf16.msra.mxu0 %v1025
        %1059 = vmatmul.bf16.gmra.mxu0 %v1036
        %v1060 = vpop.f32.mrf.mxu0
        %v1061 = vadd.f32 %v1048, %v1060
        %v1062 = vpop.f32.mrf.mxu0
        %1063 = vdwg.mxu0
        %v1064 = vmax.f32 %v1061, 0.0
        %v1065 = vpack.c.bf16 %v1064, %v1064
        %v1066 = vld [vmem:[%s9] sm:$0xf]
        %v1067 = vld [vmem:[%s9 + $0x4] sm:$0xf]
        %v1068 = vld [vmem:[%s9 + $0x8] sm:$0xf]
        %v1069 = vld [vmem:[%s9 + $0xc] sm:$0xf]
        %v1070 = vld [vmem:[%s9 + $0x10] sm:$0xf]
        %v1071 = vld [vmem:[%s9 + $0x14] sm:$0xf]
        %v1072 = vld [vmem:[%s9 + $0x18] sm:$0xf]
        %v1073 = vld [vmem:[%s9 + $0x1c] sm:$0xf]
        %v1074 = vld [vmem:[%s9 + $0x20] sm:$0xf]
        %v1075 = vld [vmem:[%s9 + $0x24] sm:$0xf]
        %v1076 = vld [vmem:[%s9 + $0x28] sm:$0xf]
        %v1077 = vld [vmem:[%s9 + $0x2c] sm:$0xf]
        %v1078 = vld [vmem:[%s9 + $0x30] sm:$0x3]
        %v1079 = vld [vmem:[%s10] sm:$0x1]
        %v1093 = vunpack.c.l.b16 %v1066
        %v1094 = vunpack.c.l.b16 %v1067
        %v1095 = vunpack.c.l.b16 %v1068
        %v1096 = vunpack.c.l.b16 %v1069
        %v1097 = vunpack.c.l.b16 %v1070
        %v1098 = vunpack.c.l.b16 %v1071
        %v1099 = vunpack.c.l.b16 %v1072
        %v1100 = vunpack.c.l.b16 %v1073
        %v1101 = vunpack.c.l.b16 %v1074
        %v1102 = vunpack.c.l.b16 %v1075
        %v1103 = vunpack.c.l.b16 %v1076
        %v1104 = vunpack.c.l.b16 %v1077
        %v1105 = vunpack.c.l.b16 %v1078
        %v1106 = vpack.c.b16 %v1094, %v1093
        %v1107 = vpack.c.b16 %v1096, %v1095
        %v1108 = vpack.c.b16 %v1098, %v1097
        %v1109 = vpack.c.b16 %v1100, %v1099
        %v1110 = vpack.c.b16 %v1102, %v1101
        %v1111 = vpack.c.b16 %v1104, %v1103
        %v1112 = vpack.c.b16 %v1105, %v1105
        %vm1119 = vcmask 818176
        %v1121 = vsel %vm1119, %v1065, 0
        %vm1123 = vcmask 1041408
        %v1125 = vsel %vm1123, %v1112, 0
        %1127 = vmatpush.bf16.msra.mxu0 0
        %1128 = vmatpush.bf16.msra.mxu0 %v1125
        %1129 = vmatpush.bf16.msra.mxu0 %v1111
        %1130 = vmatpush.bf16.msra.mxu0 %v1110
        %1131 = vmatpush.bf16.msra.mxu0 %v1109
        %1132 = vmatpush.bf16.msra.mxu0 %v1108
        %1133 = vmatpush.bf16.msra.mxu0 %v1107
        %1134 = vmatpush.bf16.msra.mxu0 %v1106
        %1135 = vmatmul.bf16.gmra.mxu0 %v1121
        %v1136 = vpop.f32.mrf.mxu0
        %v1137 = vadd.f32 %v1079, %v1136
        %v1138 = vpop.f32.mrf.mxu0
        %1139 = vdwg.mxu0
        %v1140 = vmax.f32 %v1137, 0.0
        %v1141 = vpack.c.bf16 %v1140, %v1140
        %v1142 = vld [vmem:[%s11] sm:$0xf]
        %v1143 = vld [vmem:[%s11 + $0x4] sm:$0xf]
        %v1144 = vld [vmem:[%s11 + $0x8] sm:$0x3]
        %v1145 = vld [vmem:[%s12] sm:$0x1]
        %v1149 = vunpack.c.l.b16 %v1142
        %v1150 = vunpack.c.l.b16 %v1143
        %v1151 = vunpack.c.l.b16 %v1144
        %v1152 = vpack.c.b16 %v1150, %v1149
        %v1153 = vpack.c.b16 %v1151, %v1151
        %vm1155 = vcmask 162816
        %v1157 = vsel %vm1155, %v1141, 0
        %v1160 = vsel %vm1123, %v1153, 0
        %1162 = vmatpush.bf16.msra.mxu0 0
        %1163 = vmatpush.bf16.msra.mxu0 0
        %1164 = vmatpush.bf16.msra.mxu0 0
        %1165 = vmatpush.bf16.msra.mxu0 0
        %1166 = vmatpush.bf16.msra.mxu0 0
        %1167 = vmatpush.bf16.msra.mxu0 0
        %1168 = vmatpush.bf16.msra.mxu0 %v1160
        %1169 = vmatpush.bf16.msra.mxu0 %v1152
        %1170 = vmatmul.bf16.gmra.mxu0 %v1157
        %v1171 = vpop.f32.mrf.mxu0
        %v1172 = vadd.f32 %v1145, %v1171
        %v1173 = vpop.f32.mrf.mxu0
        %1174 = vdwg.mxu0
        %vm1175 = vcmask 73728
        %1176 = vst.msk [vmem:[%s432] sm:$0x1] %vm1175, %v1172
        %s1177 = sand.u32 %s313, 1
        %s1178 = scalar_lea.sflag [#allocation3], %s1177
        %s1179 = sand.u32 %s313, 1
        %s1180 = scalar_lea.vmem [#allocation2], %s1179
        // Predicated region
        $region73: #{lenet_forward.1} parent=71 // pred_check
          %p1181 = pneg %p323
        $region74: #{lenet_forward.1} parent=71 // pred_check_branch
          %1183 = sbr.rel (%p1181) target = $region76
        $region75: #{lenet_forward.1} parent=71 // pred_region
          %1185 = vsyncadd %s1178, 0
          %s1186 = scalar_lea.hbm %s13, %s27
          %s1188 = sshll.u32 %s1180, 4
          %s1189 = int_to_ptr.vmem [resolvable:$true] %s1188
          %s1190 = sshll.u32 %s1186, 4
          %s1191 = int_to_ptr.hbm [resolvable:$true] %s1190
          %1193 = dma.vmem_to_hbm [thread:$0]  %s1189, 16, %s1191, %s1178
        $region76: #{lenet_forward.1} parent=71 // pred_fallthru
          _
      $region72: #{lenet_forward.1} parent=5 // pred_fallthru
        _
      %p1194 = scmp.le.s32.totalorder 2, %s22
      // Predicated region
      $region77: #{lenet_forward.1} parent=5 // pred_check
        %p1195 = pneg %p1194
      $region78: #{lenet_forward.1} parent=5 // pred_check_branch
        %1197 = sbr.rel (%p1195) target = $region80
      $region79: #{lenet_forward.1} parent=5 // pred_region
        %s1198 = ssub.s32 %s22, 2
        // Predicated region
        $region81: #{lenet_forward.1} parent=79 // pred_check
          %p1199 = pneg %p329
        $region82: #{lenet_forward.1} parent=79 // pred_check_branch
          %1201 = sbr.rel (%p1199) target = $region84
        $region83: #{lenet_forward.1} parent=79 // pred_region
          %s1202 = sand.u32 %s314, 1
          %s1203 = scalar_lea.sflag [#allocation3], %s1202
          %s1204 = sand.u32 %s314, 1
          %s1205 = scalar_lea.vmem [#allocation2], %s1204
          %1207 = dma.done %s1203, 16
        $region84: #{lenet_forward.1} parent=79 // pred_fallthru
          _
      $region80: #{lenet_forward.1} parent=5 // pred_fallthru
        _
    $region6: #{lenet_forward.1} parent=1 // loop_footer
      %s26 = sadd.s32 1, %s22
    $region7: #{lenet_forward.1} parent=1 // loop_footer_branch
      %21 = sbr.rel target = $region3
    $region8: #{lenet_forward.1} parent=1 // loop_exit
      _
    %1208 = vsyncpa [#allocation3], 1
    %s1209 = scalar_lea.sflag [#allocation3], 1
    %1210 = vsyncpa %s1209, 1

</llo_original>
